<compile_context>
chip_gen: v5e
topology: v5e:2x2
jax: 0.10.0
libtpu: 0.0.40
codegen_flags: <defaults>
</compile_context>

<pallas_src>
from typing import NamedTuple

import jax
import jax.numpy as jnp
from jax.experimental import pallas as pl
from jax.experimental.pallas import tpu as pltpu


def _roundup(x: int, m: int) -> int:
    return (x + m - 1) // m * m


# ---------------------------------------------------------------------------
# Packed-parameter slab layout (every section lane-padded to `lanes` columns)
# ---------------------------------------------------------------------------
class SlabLayout(NamedTuple):
    state_dim: int
    num_agents: int
    num_agents_pad: int
    hidden0: int
    hidden1: int
    lanes: int
    rows: int
    r_w1_state: int
    r_w1_agent: int
    r_b1: int
    r_w2: int
    r_b2: int
    r_w3: int
    r_b3: int


def pack_params(params, state_dim, num_agents):
    """Pack (w1,b1,w2,b2,w3,b3) [weights in (in,out) layout] into one f32 slab."""
    w1, b1, w2, b2, w3, b3 = params
    h0 = w1.shape[1]
    h1 = w2.shape[1]
    lanes = _roundup(max(h0, h1, 1), 128)      # lane width (>= 128)
    ds_pad = _roundup(state_dim, 8)
    a_pad = _roundup(num_agents, 8)

    r_w1_state = 0
    r_w1_agent = ds_pad
    r_b1 = r_w1_agent + a_pad
    r_w2 = r_b1 + 8
    r_b2 = r_w2 + lanes                        # W2 stored as a full (P, P) block
    r_w3 = r_b2 + 8
    r_b3 = r_w3 + 1                            # b3 scalar lives in the w3 section
    rows = r_w3 + 8

    slab = jnp.zeros((rows, lanes), jnp.float32)
    slab = slab.at[r_w1_state:r_w1_state + state_dim, 0:h0].set(w1[:state_dim])
    slab = slab.at[r_w1_agent:r_w1_agent + num_agents, 0:h0].set(w1[state_dim:])
    slab = slab.at[r_b1, 0:h0].set(b1.reshape(-1))
    slab = slab.at[r_w2:r_w2 + h0, 0:h1].set(w2)
    slab = slab.at[r_b2, 0:h1].set(b2.reshape(-1))
    slab = slab.at[r_w3, 0:h1].set(w3.reshape(-1))
    slab = slab.at[r_b3, 0].set(b3.reshape(-1)[0])

    layout = SlabLayout(state_dim, num_agents, a_pad, h0, h1, lanes, rows,
                        r_w1_state, r_w1_agent, r_b1, r_w2, r_b2, r_w3, r_b3)
    return slab, layout


# ---------------------------------------------------------------------------
# Pallas kernel: value = fc3(tanh(fc2(tanh(fc1([state, onehot(agent)])))))
# ---------------------------------------------------------------------------
def _make_kernel(layout: SlabLayout):
    ds = layout.state_dim
    a_pad = layout.num_agents_pad
    lanes = layout.lanes

    def kernel(state_ref, aidx_ref, slab_ref, out_ref):
        tb = state_ref.shape[0]

        x = state_ref[...]                                                # (TB, Ds) f32
        aid = aidx_ref[...]                                               # (TB, 1)  i32

        # Static slices into the resident packed-parameter slab (zero-cost views).
        w1s = slab_ref[layout.r_w1_state:layout.r_w1_state + ds, :]       # (Ds, P)
        w1a = slab_ref[layout.r_w1_agent:layout.r_w1_agent + a_pad, :]    # (Ap, P)
        b1 = slab_ref[layout.r_b1:layout.r_b1 + 1, :]                     # (1, P)
        w2 = slab_ref[layout.r_w2:layout.r_w2 + lanes, :]                 # (P, P)
        b2 = slab_ref[layout.r_b2:layout.r_b2 + 1, :]                     # (1, P)
        w3 = slab_ref[layout.r_w3:layout.r_w3 + 1, :]                     # (1, P)
        b3 = slab_ref[layout.r_b3:layout.r_b3 + 1, 0:1]                   # (1, 1)

        # In-kernel one-hot over the (8-padded) agent axis; replaces the old
        # host-side jax.nn.one_hot + concatenate.
        onehot = (jax.lax.broadcasted_iota(jnp.int32, (tb, a_pad), 1)
                  == aid).astype(jnp.float32)                             # (TB, Ap)

        h1 = jnp.tanh(
            jnp.dot(x, w1s, preferred_element_type=jnp.float32)
            + jnp.dot(onehot, w1a, preferred_element_type=jnp.float32)
            + b1)                                                         # (TB, P); pad lanes tanh(0)=0
        h2 = jnp.tanh(
            jnp.dot(h1, w2, preferred_element_type=jnp.float32) + b2)     # (TB, P)
        # fc3 has one output: lane reduction instead of a skinny N=1 matmul.
        v = jnp.sum(h2 * w3, axis=-1, keepdims=True) + b3                 # (TB, 1)
        out_ref[...] = v.astype(out_ref.dtype)

    return kernel


def mappo_critic_forward(state, agent_idx, slab, layout, batch_tile=512):
    """state: (B, state_dim) f32; agent_idx: (B, 1) int32 agent ids.

    Returns (B, 1) critic values, same semantics as the PyTorch
    forward(state, one_hot(agent_idx)).
    """
    b, ds = state.shape
    assert ds == layout.state_dim

    tb = batch_tile if b >= batch_tile else _roundup(b, 8)
    bp = _roundup(b, tb)
    if bp != b:  # pad batch to a whole number of sublane-aligned tiles
        state = jnp.pad(state, ((0, bp - b), (0, 0)))
        agent_idx = jnp.pad(agent_idx, ((0, bp - b), (0, 0)))

    # NOTE: output block is (tb, 1); for very large B a lane-dense (1, tb)
    # layout would avoid masked stores, skipped here to keep lowering simple.
    out = pl.pallas_call(
        _make_kernel(layout),
        out_shape=jax.ShapeDtypeStruct((bp, 1), jnp.float32),
        grid_spec=pltpu.PrefetchScalarGridSpec(
            num_scalar_prefetch=0,
            grid=(bp // tb,),
            in_specs=[
                pl.BlockSpec((tb, ds), lambda i: (i, 0)),        # x tiles stream
                pl.BlockSpec((tb, 1), lambda i: (i, 0)),         # agent ids stream
                pl.BlockSpec((layout.rows, layout.lanes),
                             lambda i: (0, 0)),                  # params: VMEM-resident
            ],
            out_specs=pl.BlockSpec((tb, 1), lambda i: (i, 0)),
        ),
        compiler_params=pltpu.CompilerParams(
            dimension_semantics=("parallel",),   # megacore / v7x 2-TC sharding
            vmem_limit_bytes=8 * 1024 * 1024,    # real working set is ~1-2 MiB
        ),
    )(state, agent_idx, slab)
    return out[:b]


# ---------------------------------------------------------------------------
# Deterministic parameter init (matches nn.init.orthogonal_ semantics; biases 0)
# ---------------------------------------------------------------------------
def orthogonal_init(key, rows, cols):
    n, m = max(rows, cols), min(rows, cols)
    a = jax.random.normal(key, (n, m), dtype=jnp.float32)
    q, r = jnp.linalg.qr(a)
    q = q * jnp.sign(jnp.diagonal(r))
    if rows < cols:
        q = q.T
    return q[:rows, :cols]


def make_params(key, state_plus_agents, hidden_dims):
    h0, h1 = hidden_dims
    k1, k2, k3 = jax.random.split(key, 3)
    # PyTorch Linear weight is (out, in); build it that way then transpose to (in, out).
    w1 = orthogonal_init(k1, h0, state_plus_agents).T         # (in, h0)
    w2 = orthogonal_init(k2, h1, h0).T                        # (h0, h1)
    w3 = orthogonal_init(k3, 1, h1).T                         # (h1, 1)
    b1 = jnp.zeros((1, h0), jnp.float32)
    b2 = jnp.zeros((1, h1), jnp.float32)
    b3 = jnp.zeros((1, 1), jnp.float32)
    return w1, b1, w2, b2, w3, b3


def reference_forward(state, agent_onehot, params):
    w1, b1, w2, b2, w3, b3 = params
    x = jnp.concatenate([state, agent_onehot], axis=-1)
    x = jnp.tanh(x @ w1 + b1)
    x = jnp.tanh(x @ w2 + b2)
    return x @ w3 + b3


# TODO(synk): critic_loss (clipped value loss) is a training-time utility, not
# part of the forward pass, and is not implemented here.

if __name__ == "__main__":
    # Small, forward-implied shapes: state_dim=16, num_agents=4, hidden=(32, 32)
    batch = 8
    state_dim = 16
    num_agents = 4
    hidden_dims = (32, 32)

    key = jax.random.PRNGKey(0)
    k_state, k_agent, k_param = jax.random.split(key, 3)

    state = jax.random.normal(k_state, (batch, state_dim), dtype=jnp.float32)
    agent_idx = jax.random.randint(k_agent, (batch, 1), 0, num_agents,
                                   dtype=jnp.int32)

    params = make_params(k_param, state_dim + num_agents, hidden_dims)
    slab, layout = pack_params(params, state_dim, num_agents)

    forward = jax.jit(mappo_critic_forward, static_argnums=(3,))
    value = forward(state, agent_idx, slab, layout)
    value = jax.block_until_ready(value)

    # Reference path mirrors the PyTorch module (explicit one-hot + concat).
    agent_onehot = jax.nn.one_hot(agent_idx[:, 0], num_agents, dtype=jnp.float32)
    ref = reference_forward(state, agent_onehot, params)

    assert value.shape == (batch, 1)
    assert jnp.allclose(value, ref, atol=1e-5, rtol=1e-5), (value, ref)

    print("KERNEL_OK")
</pallas_src>

<mosaic_0001>
module attributes {stable_mosaic.version = 11 : i64} {
  func.func @kernel(%arg0: i32, %arg1: memref<8x16xf32, #tpu.memory_space<vmem>>, %arg2: memref<8x1xi32, #tpu.memory_space<vmem>>, %arg3: memref<176x128xf32, #tpu.memory_space<vmem>>, %arg4: memref<8x1xf32, #tpu.memory_space<vmem>>) attributes {dimension_semantics = [#tpu.dimension_semantics<parallel>], iteration_bounds = array<i64: 1>, scalar_prefetch = 0 : i64, scratch_operands = 0 : i64, tpu.core_type = #tpu.core_type<tc>, window_params = [{transform_indices = @transform_0, window_bounds = array<i64: 8, 16>}, {transform_indices = @transform_1, window_bounds = array<i64: 8, 1>}, {pipeline_mode = #tpu.pipeline_mode<synchronous>, transform_indices = @transform_2, window_bounds = array<i64: 176, 128>}, {transform_indices = @transform_3, window_bounds = array<i64: 8, 1>}]} {
    %c0 = arith.constant 0 : index
    %c0_0 = arith.constant 0 : index
    %0 = vector.load %arg1[%c0, %c0_0] : memref<8x16xf32, #tpu.memory_space<vmem>>, vector<8x16xf32>
    %c0_1 = arith.constant 0 : index
    %c0_2 = arith.constant 0 : index
    %1 = vector.load %arg2[%c0_1, %c0_2] : memref<8x1xi32, #tpu.memory_space<vmem>>, vector<8x1xi32>
    %c0_3 = arith.constant 0 : index
    %c0_4 = arith.constant 0 : index
    %2 = vector.load %arg3[%c0_3, %c0_4] : memref<176x128xf32, #tpu.memory_space<vmem>>, vector<16x128xf32>
    %c16 = arith.constant 16 : index
    %c0_5 = arith.constant 0 : index
    %3 = vector.load %arg3[%c16, %c0_5] : memref<176x128xf32, #tpu.memory_space<vmem>>, vector<8x128xf32>
    %c24 = arith.constant 24 : index
    %c0_6 = arith.constant 0 : index
    %4 = vector.load %arg3[%c24, %c0_6] : memref<176x128xf32, #tpu.memory_space<vmem>>, vector<1x128xf32>
    %c32 = arith.constant 32 : index
    %c0_7 = arith.constant 0 : index
    %5 = vector.load %arg3[%c32, %c0_7] : memref<176x128xf32, #tpu.memory_space<vmem>>, vector<128x128xf32>
    %c160 = arith.constant 160 : index
    %c0_8 = arith.constant 0 : index
    %6 = vector.load %arg3[%c160, %c0_8] : memref<176x128xf32, #tpu.memory_space<vmem>>, vector<1x128xf32>
    %c168 = arith.constant 168 : index
    %c0_9 = arith.constant 0 : index
    %7 = vector.load %arg3[%c168, %c0_9] : memref<176x128xf32, #tpu.memory_space<vmem>>, vector<1x128xf32>
    %c169 = arith.constant 169 : index
    %c0_10 = arith.constant 0 : index
    %8 = vector.load %arg3[%c169, %c0_10] : memref<176x128xf32, #tpu.memory_space<vmem>>, vector<1x1xf32>
    %9 = tpu.iota {dimensions = array<i32: 1>} : vector<8x8xi32>
    %10 = vector.broadcast %1 : vector<8x1xi32> to vector<8x8xi32>
    %11 = arith.cmpi eq, %9, %10 : vector<8x8xi32>
    %12 = arith.extui %11 : vector<8x8xi1> to vector<8x8xi32>
    %13 = arith.sitofp %12 : vector<8x8xi32> to vector<8x8xf32>
    %cst = arith.constant dense<0.000000e+00> : vector<8x128xf32>
    %14 = tpu.matmul %0, %2, %cst {dimension_numbers = #tpu.dot_dimension_numbers<[1], [0], [0], [1], [0, 0, 1, 1], [], []>} : vector<8x16xf32>, vector<16x128xf32>, vector<8x128xf32> -> vector<8x128xf32>
    %cst_11 = arith.constant dense<0.000000e+00> : vector<8x128xf32>
    %15 = tpu.matmul %13, %3, %cst_11 {dimension_numbers = #tpu.dot_dimension_numbers<[1], [0], [0], [1], [0, 0, 1, 1], [], []>} : vector<8x8xf32>, vector<8x128xf32>, vector<8x128xf32> -> vector<8x128xf32>
    %16 = arith.addf %14, %15 : vector<8x128xf32>
    %17 = vector.broadcast %4 : vector<1x128xf32> to vector<8x128xf32>
    %18 = arith.addf %16, %17 : vector<8x128xf32>
    %19 = math.tanh %18 : vector<8x128xf32>
    %cst_12 = arith.constant dense<0.000000e+00> : vector<8x128xf32>
    %20 = tpu.matmul %19, %5, %cst_12 {dimension_numbers = #tpu.dot_dimension_numbers<[1], [0], [0], [1], [0, 0, 1, 1], [], []>} : vector<8x128xf32>, vector<128x128xf32>, vector<8x128xf32> -> vector<8x128xf32>
    %21 = vector.broadcast %6 : vector<1x128xf32> to vector<8x128xf32>
    %22 = arith.addf %20, %21 : vector<8x128xf32>
    %23 = math.tanh %22 : vector<8x128xf32>
    %24 = vector.broadcast %7 : vector<1x128xf32> to vector<8x128xf32>
    %25 = arith.mulf %23, %24 : vector<8x128xf32>
    %cst_13 = arith.constant dense<0.000000e+00> : vector<8xf32>
    %26 = vector.multi_reduction <add>, %25, %cst_13 [1] : vector<8x128xf32> to vector<8xf32>
    %27 = vector.shape_cast %26 : vector<8xf32> to vector<8x1xf32>
    %28 = vector.broadcast %8 : vector<1x1xf32> to vector<8x1xf32>
    %29 = arith.addf %27, %28 : vector<8x1xf32>
    %c0_14 = arith.constant 0 : index
    %c0_15 = arith.constant 0 : index
    %30 = vector.load %arg4[%c0_14, %c0_15] : memref<8x1xf32, #tpu.memory_space<vmem>>, vector<8x1xf32>
    tpu.vector_store %arg4[%c0_14, %c0_15], %29 {strides = array<i32>} : memref<8x1xf32, #tpu.memory_space<vmem>>, vector<8x1xf32>,
    return
  }
  func.func @transform_0(%arg0: i32) -> (i32, i32) {
    %c0_i32 = arith.constant 0 : i32
    %c0_i32_0 = arith.constant 0 : i32
    return %arg0, %c0_i32 : i32, i32
  }
  func.func @transform_1(%arg0: i32) -> (i32, i32) {
    %c0_i32 = arith.constant 0 : i32
    %c0_i32_0 = arith.constant 0 : i32
    return %arg0, %c0_i32 : i32, i32
  }
  func.func @transform_2(%arg0: i32) -> (i32, i32) {
    %c0_i32 = arith.constant 0 : i32
    %c0_i32_0 = arith.constant 0 : i32
    %c0_i32_1 = arith.constant 0 : i32
    return %c0_i32, %c0_i32_0 : i32, i32
  }
  func.func @transform_3(%arg0: i32) -> (i32, i32) {
    %c0_i32 = arith.constant 0 : i32
    %c0_i32_0 = arith.constant 0 : i32
    return %arg0, %c0_i32 : i32, i32
  }
}

</mosaic_0001>

<llo_original>
// kernel: mappo_critic_forward.1
$region0: #{mappo_critic_forward.1}
  #allocation0 [shape = 'u32[]', space=smem, size = 0x4, offset = 0x4, fixed_abs, tag = 'smem constant byte address 0x4 - core index']
  #allocation1 [shape = 'u32[72,128]{1,0:T(1,128)}', space=vmem, size = 0x9000, scoped, tag = 'internal scratch']
  %s0 = inlined_call_operand.vmem [shape: f32[8,16], index: 0, kind: input, shape index: {}]
  %s1 = inlined_call_operand.vmem [shape: s32[8,1], index: 1, kind: input, shape index: {}]
  %s2 = inlined_call_operand.hbm [shape: f32[176,128], index: 2, kind: input, shape index: {}]
  %s3 = inlined_call_operand.vmem [shape: f32[8,1], index: 3, kind: output, shape index: {}]
  %s4 = sld [smem:[#allocation0]]
  $region26: #{mappo_critic_forward.1} parent=0
    _
  %s6 = ssub.s32 1, %s4
  %s7 = scalar_select 0, %s6, %s4
  $region1: #{mappo_critic_forward.1} parent=0
    #allocation2 [shape = 'u8[90112]{0}', space=vmem, size = 0x16000, scoped, tag = 'input window, operand 2, single buffered']
    #allocation3 [shape = 's32[1]{0}', space=sflag, size = 0x4, scoped, tag = 'scoped memory for mappo_critic_forward.1']
    %8 = vsyncpa [#allocation3], 0
    // Predicated region
    $region2: #{mappo_critic_forward.1} parent=1 // pred_check
      _
    $region3: #{mappo_critic_forward.1} parent=1 // pred_check_branch
      %10 = sbr.rel (0) target = $region5
    $region4: #{mappo_critic_forward.1} parent=1 // pred_region
      _
    $region5: #{mappo_critic_forward.1} parent=1 // pred_fallthru
      _
    // Predicated region
    $region6: #{mappo_critic_forward.1} parent=1 // pred_check
      _
    $region7: #{mappo_critic_forward.1} parent=1 // pred_check_branch
      %12 = sbr.rel (0) target = $region9
    $region8: #{mappo_critic_forward.1} parent=1 // pred_region
      _
    $region9: #{mappo_critic_forward.1} parent=1 // pred_fallthru
      _
    // Predicated region
    $region10: #{mappo_critic_forward.1} parent=1 // pred_check
      _
    $region11: #{mappo_critic_forward.1} parent=1 // pred_check_branch
      %14 = sbr.rel (0) target = $region13
    $region12: #{mappo_critic_forward.1} parent=1 // pred_region
      %16 = vsyncadd [#allocation3], 0
      %s17 = sshll.u32 %s2, 4
      %s18 = int_to_ptr.hbm [resolvable:$true] %s17
      %s19 = sshll.u32 [#allocation2], 4
      %s20 = int_to_ptr.vmem [resolvable:$true] %s19
      %25 = dma.hbm_to_vmem [thread:$0]  %s18, 2816, %s20, [#allocation3], 128, 128, 8
    $region13: #{mappo_critic_forward.1} parent=1 // pred_fallthru
      _
    // Predicated region
    $region14: #{mappo_critic_forward.1} parent=1 // pred_check
      _
    $region15: #{mappo_critic_forward.1} parent=1 // pred_check_branch
      %27 = sbr.rel (0) target = $region17
    $region16: #{mappo_critic_forward.1} parent=1 // pred_region
      %29 = dma.done [#allocation3], 2816
    $region17: #{mappo_critic_forward.1} parent=1 // pred_fallthru
      _
    %v30 = vld [vmem:[%s0] sm:$0xff]
    %v31 = vld [vmem:[%s1] sm:$0xff]
    %v32 = vld [vmem:[#allocation2] sm:$0xff]
    %v33 = vld [vmem:[#allocation2 + $0x8] sm:$0xff]
    %v34 = vld [vmem:[#allocation2 + $0x10] sm:$0xff]
    %v35 = vld [vmem:[#allocation2 + $0x18] sm:$0x1]
    %v36 = vld [vmem:[#allocation2 + $0x20] sm:$0xff]
    %v37 = vld [vmem:[#allocation2 + $0x28] sm:$0xff]
    %v38 = vld [vmem:[#allocation2 + $0x30] sm:$0xff]
    %v39 = vld [vmem:[#allocation2 + $0x38] sm:$0xff]
    %v40 = vld [vmem:[#allocation2 + $0x40] sm:$0xff]
    %v41 = vld [vmem:[#allocation2 + $0x48] sm:$0xff]
    %v42 = vld [vmem:[#allocation2 + $0x50] sm:$0xff]
    %v43 = vld [vmem:[#allocation2 + $0x58] sm:$0xff]
    %v44 = vld [vmem:[#allocation2 + $0x60] sm:$0xff]
    %v45 = vld [vmem:[#allocation2 + $0x68] sm:$0xff]
    %v46 = vld [vmem:[#allocation2 + $0x70] sm:$0xff]
    %v47 = vld [vmem:[#allocation2 + $0x78] sm:$0xff]
    %v48 = vld [vmem:[#allocation2 + $0x80] sm:$0xff]
    %v49 = vld [vmem:[#allocation2 + $0x88] sm:$0xff]
    %v50 = vld [vmem:[#allocation2 + $0x90] sm:$0xff]
    %v51 = vld [vmem:[#allocation2 + $0x98] sm:$0xff]
    %v52 = vld [vmem:[#allocation2 + $0xa0] sm:$0x1]
    %v53 = vld [vmem:[#allocation2 + $0xa8] sm:$0x1]
    %v54 = vld [vmem:[#allocation2 + $0xa9] sm:$0x1]
    %v55 = vlaneseq
    %v56 = vand.u32 %v55, 127
    %57 = vset.pattern.permute.xlu0 0
    %58 = vperm.xlu0 %57, %v31
    %v59 = vpop.permute.xlu0 %58
    %vm60 = vcmp.eq.s32.totalorder %v56, %v59
    %v61 = vsel %vm60, 1, 0
    %v62 = vcvt.s32.f32 %v61
    %vm63 = vcmask 64512
    %v65 = vsel %vm63, %v62, 0
    %67 = vmatpush.msra.mxu0 0.0
    %68 = vmatpush.msra.mxu0 0.0
    %69 = vmatpush.msra.mxu0 0.0
    %70 = vmatpush.msra.mxu0 0.0
    %71 = vmatpush.msra.mxu0 0.0
    %72 = vmatpush.msra.mxu0 0.0
    %73 = vmatpush.msra.mxu0 0.0
    %74 = vmatpush.msra.mxu0 0.0
    %75 = vmatpush.msra.mxu0 0.0
    %76 = vmatpush.msra.mxu0 0.0
    %77 = vmatpush.msra.mxu0 0.0
    %78 = vmatpush.msra.mxu0 0.0
    %79 = vmatpush.msra.mxu0 0.0
    %80 = vmatpush.msra.mxu0 0.0
    %81 = vmatpush.msra.mxu0 0.0
    %82 = vmatpush.msra.mxu0 %v34
    %83 = vmatmul.f32.gmra.mxu0 %v65
    %v84 = vpop.f32.mrf.mxu0
    %v85 = vadd.f32 0.0, %v84
    %86 = vdwg.mxu0
    %vm87 = vcmask 130048
    %v89 = vsel %vm87, %v30, 0
    %91 = vmatpush.msra.mxu0 0.0
    %92 = vmatpush.msra.mxu0 0.0
    %93 = vmatpush.msra.mxu0 0.0
    %94 = vmatpush.msra.mxu0 0.0
    %95 = vmatpush.msra.mxu0 0.0
    %96 = vmatpush.msra.mxu0 0.0
    %97 = vmatpush.msra.mxu0 0.0
    %98 = vmatpush.msra.mxu0 0.0
    %99 = vmatpush.msra.mxu0 0.0
    %100 = vmatpush.msra.mxu0 0.0
    %101 = vmatpush.msra.mxu0 0.0
    %102 = vmatpush.msra.mxu0 0.0
    %103 = vmatpush.msra.mxu0 0.0
    %104 = vmatpush.msra.mxu0 0.0
    %105 = vmatpush.msra.mxu0 %v33
    %106 = vmatpush.msra.mxu0 %v32
    %107 = vmatmul.f32.gmra.mxu0 %v89
    %v108 = vpop.f32.mrf.mxu0
    %v109 = vadd.f32 %v85, %v108
    %110 = vdwg.mxu0
    %v111 = vperm.slane %v35, 0
    %v112 = vadd.f32 %v109, %v111
    %v113 = vtanh.pop %v112
    %v114 = vperm.slane %v52, 0
    %115 = vmatpush.msra.mxu0 %v51
    %116 = vmatpush.msra.mxu0 %v50
    %117 = vmatpush.msra.mxu0 %v49
    %118 = vmatpush.msra.mxu0 %v48
    %119 = vmatpush.msra.mxu0 %v47
    %120 = vmatpush.msra.mxu0 %v46
    %121 = vmatpush.msra.mxu0 %v45
    %122 = vmatpush.msra.mxu0 %v44
    %123 = vmatpush.msra.mxu0 %v43
    %124 = vmatpush.msra.mxu0 %v42
    %125 = vmatpush.msra.mxu0 %v41
    %126 = vmatpush.msra.mxu0 %v40
    %127 = vmatpush.msra.mxu0 %v39
    %128 = vmatpush.msra.mxu0 %v38
    %129 = vmatpush.msra.mxu0 %v37
    %130 = vmatpush.msra.mxu0 %v36
    %131 = vmatmul.f32.gmra.mxu0 %v113
    %v132 = vpop.f32.mrf.mxu0
    %v133 = vadd.f32 %v114, %v132
    %134 = vdwg.mxu0
    %v135 = vtanh.pop %v133
    %v136 = vperm.slane %v53, 0
    %v137 = vmul.f32 %v135, %v136
    %138 = vadd.xlane.f32.xlu0 %v137
    %v139 = vpop.xlane.xlu0 %138
    %v140 = vperm.slane %v54, 0
    %v141 = vadd.f32 %v139, %v140
    %vm142 = vcmask 7168
    %143 = vst.msk [vmem:[%s3] sm:$0xff] %vm142, %v141
    // Predicated region
    $region18: #{mappo_critic_forward.1} parent=1 // pred_check
      _
    $region19: #{mappo_critic_forward.1} parent=1 // pred_check_branch
      %145 = sbr.rel (0) target = $region21
    $region20: #{mappo_critic_forward.1} parent=1 // pred_region
      _
    $region21: #{mappo_critic_forward.1} parent=1 // pred_fallthru
      _
    // Predicated region
    $region22: #{mappo_critic_forward.1} parent=1 // pred_check
      _
    $region23: #{mappo_critic_forward.1} parent=1 // pred_check_branch
      %147 = sbr.rel (0) target = $region25
    $region24: #{mappo_critic_forward.1} parent=1 // pred_region
      _
    $region25: #{mappo_critic_forward.1} parent=1 // pred_fallthru
      _
    %148 = vsyncpa [#allocation3], 1

</llo_original>
